<compile_context>
chip_gen: v6e
topology: v6e:2x2x1
jax: 0.10.0
libtpu: 0.0.40
codegen_flags: <defaults>
</compile_context>

<pallas_src>
import functools

import jax
import jax.numpy as jnp
from jax import lax
from jax.experimental import pallas as pl
from jax.experimental.pallas import tpu as pltpu


def _byol_loss_kernel(z1_ref, z2_ref, p1_ref, p2_ref, out_ref, acc_ref, *,
                      scale, batch, tile_batch, steps_per_partial, mask_rows):
    """Accumulates per-row cosines into a VMEM vector; finalizes at last step.

    scale == -0.5 / B, so out_partial = -0.5/B * sum_rows(cos(p1,z2)+cos(p2,z1))
    and the wrapper's sum over partials reproduces D(p1,z2)/2 + D(p2,z1)/2.
    """
    c = pl.program_id(0)   # partial / core axis ("parallel")
    i = pl.program_id(1)   # batch-tile reduction axis ("arbitrary")

    @pl.when(i == 0)
    def _():
        acc_ref[...] = jnp.zeros_like(acc_ref)

    # torch F.normalize uses eps=1e-12 on the norm; since sqrt is monotone,
    # max(||x||, eps) == sqrt(max(sum(x*x), eps**2)), so
    # cos = s_pz * rsqrt(max(s_pp, eps^2)) * rsqrt(max(s_zz, eps^2)).
    eps2 = 1e-24  # python float -> weak-typed literal, no captured constant

    def row_cos(p, z):
        p = p.astype(jnp.float32)
        z = z.astype(jnp.float32)
        s_pz = jnp.sum(p * z, axis=1, keepdims=True)   # (TB, 1)
        s_pp = jnp.sum(p * p, axis=1, keepdims=True)   # (TB, 1)
        s_zz = jnp.sum(z * z, axis=1, keepdims=True)   # (TB, 1)
        return (s_pz
                * lax.rsqrt(jnp.maximum(s_pp, eps2))
                * lax.rsqrt(jnp.maximum(s_zz, eps2)))

    cos_block = row_cos(p1_ref[...], z2_ref[...]) + row_cos(p2_ref[...], z1_ref[...])

    if mask_rows:
        # Last tile may extend past B: zero the contribution of padded rows.
        row_base = (c * steps_per_partial + i) * tile_batch
        rows = lax.broadcasted_iota(jnp.int32, cos_block.shape, 0) + row_base
        cos_block = jnp.where(rows < batch, cos_block, 0.0)

    # Pure VALU vector accumulate each step; stays hidden under the DMA.
    acc_ref[...] += cos_block

    @pl.when(i == pl.num_programs(1) - 1)
    def _():
        # One sublane reduce + fused (negate * 0.5 * 1/B) scalar multiply.
        out_ref[0, 0] = jnp.sum(acc_ref[...]) * scale


def byol_loss(z1, z2, p1, p2, *, block_batch=1024, vmem_budget_bytes=16 << 20):
    """L = D(p1, z2)/2 + D(p2, z1)/2 with D(p, z) = -mean(cos(p_i, z_i))."""
    assert z1.shape == z2.shape == p1.shape == p2.shape
    assert z1.ndim == 2
    B, D = z1.shape
    itemsize = jnp.dtype(z1.dtype).itemsize

    # ---- D- and VMEM-budget-aware batch tile (4 inputs, double-buffered) ----
    row_align = 8 if itemsize >= 4 else (16 if itemsize == 2 else 32)
    bytes_per_row = 4 * 2 * D * itemsize
    tb_cap = max(row_align,
                 (vmem_budget_bytes // bytes_per_row) // row_align * row_align)
    tb = max(row_align, (min(block_batch, tb_cap) // row_align) * row_align)
    if B <= tb:
        tb, steps, mask_rows = B, 1, False          # single full-extent block
    else:
        steps = -(-B // tb)                          # cdiv
        mask_rows = (B % tb) != 0

    # ---- split the reduction into 2 partials when it divides evenly ----
    # (engages both TensorCores on v7x via the "parallel" axis; no-op on 1-TC chips)
    num_partials = 2 if (steps >= 2 and steps % 2 == 0) else 1
    steps_per_partial = steps // num_partials
    grid = (num_partials, steps_per_partial)

    in_spec = pl.BlockSpec((tb, D), lambda c, i: (c * steps_per_partial + i, 0))
    out_spec = pl.BlockSpec((1, 1), lambda c, i: (c, 0),
                            memory_space=pltpu.MemorySpace.SMEM)

    input_block_bytes = 4 * 2 * tb * D * itemsize
    vmem_limit = max(4 << 20,
                     min(int(input_block_bytes * 1.5) + (2 << 20), 64 << 20))

    kernel = functools.partial(
        _byol_loss_kernel,
        scale=-0.5 / B,            # plain Python float: no captured jnp constant
        batch=B,
        tile_batch=tb,
        steps_per_partial=steps_per_partial,
        mask_rows=mask_rows,
    )

    partials = pl.pallas_call(
        kernel,
        out_shape=jax.ShapeDtypeStruct((num_partials, 1), jnp.float32),
        grid_spec=pltpu.PrefetchScalarGridSpec(
            num_scalar_prefetch=0,
            grid=grid,
            in_specs=[in_spec, in_spec, in_spec, in_spec],
            out_specs=out_spec,
            scratch_shapes=[pltpu.VMEM((tb, 1), jnp.float32)],
        ),
        compiler_params=pltpu.CompilerParams(
            dimension_semantics=("parallel", "arbitrary"),
            vmem_limit_bytes=vmem_limit,
        ),
    )(z1, z2, p1, p2)
    return jnp.sum(partials)


def byol_loss_ref(z1, z2, p1, p2):
    # pure-JAX reference mirroring the torch module for verification
    eps = 1e-12

    def d(p, z):
        p = p / jnp.maximum(jnp.linalg.norm(p, axis=1, keepdims=True), eps)
        z = z / jnp.maximum(jnp.linalg.norm(z, axis=1, keepdims=True), eps)
        return -jnp.mean(jnp.sum(p * z, axis=1))

    return d(p1, z2) / 2 + d(p2, z1) / 2


if __name__ == "__main__":
    key = jax.random.PRNGKey(0)

    def make(k, B, D, dtype=jnp.float32):
        ks = jax.random.split(k, 4)
        return [jax.random.normal(kk, (B, D), dtype=jnp.float32).astype(dtype)
                for kk in ks]

    # 1) tiny single-block case.
    k, key = jax.random.split(key)
    z1, z2, p1, p2 = make(k, 8, 32)
    loss = byol_loss(z1, z2, p1, p2)
    jax.block_until_ready(loss)
    ref = byol_loss_ref(z1, z2, p1, p2)
    assert jnp.allclose(loss, ref, atol=1e-5, rtol=1e-4), (loss, ref)

    # 2) multi-tile accumulation + two-partial ("parallel") path (grid (2, 2)).
    k, key = jax.random.split(key)
    z1, z2, p1, p2 = make(k, 32, 128)
    loss = byol_loss(z1, z2, p1, p2, block_batch=8)
    jax.block_until_ready(loss)
    ref = byol_loss_ref(z1, z2, p1, p2)
    assert jnp.allclose(loss, ref, atol=1e-5, rtol=1e-4), (loss, ref)

    # 3) non-dividing batch -> masked partial last tile (B=36, tb=8, 5 steps).
    k, key = jax.random.split(key)
    z1, z2, p1, p2 = make(k, 36, 128)
    loss = byol_loss(z1, z2, p1, p2, block_batch=8)
    jax.block_until_ready(loss)
    ref = byol_loss_ref(z1, z2, p1, p2)
    assert jnp.allclose(loss, ref, atol=1e-5, rtol=1e-4), (loss, ref)

    # 4) bf16 inputs (halved HBM traffic; 16-row tile alignment path).
    k, key = jax.random.split(key)
    z1, z2, p1, p2 = make(k, 48, 64, dtype=jnp.bfloat16)
    loss = byol_loss(z1, z2, p1, p2, block_batch=16)
    jax.block_until_ready(loss)
    ref = byol_loss_ref(*(a.astype(jnp.float32) for a in (z1, z2, p1, p2)))
    assert jnp.allclose(loss, ref, atol=1e-5, rtol=1e-4), (loss, ref)

    print("KERNEL_OK")
</pallas_src>

<mosaic_0001>
module attributes {stable_mosaic.version = 11 : i64} {
  func.func @_byol_loss_kernel(%arg0: i32, %arg1: i32, %arg2: memref<8x32xf32, #tpu.memory_space<vmem>>, %arg3: memref<8x32xf32, #tpu.memory_space<vmem>>, %arg4: memref<8x32xf32, #tpu.memory_space<vmem>>, %arg5: memref<8x32xf32, #tpu.memory_space<vmem>>, %arg6: memref<1x1xf32, #tpu.memory_space<smem>>, %arg7: memref<8x1xf32, #tpu.memory_space<vmem>>) attributes {dimension_semantics = [#tpu.dimension_semantics<parallel>, #tpu.dimension_semantics<arbitrary>], iteration_bounds = array<i64: 1, 1>, scalar_prefetch = 0 : i64, scratch_operands = 1 : i64, tpu.core_type = #tpu.core_type<tc>, window_params = [{transform_indices = @transform_0, window_bounds = array<i64: 8, 32>}, {transform_indices = @transform_1, window_bounds = array<i64: 8, 32>}, {transform_indices = @transform_2, window_bounds = array<i64: 8, 32>}, {transform_indices = @transform_3, window_bounds = array<i64: 8, 32>}, {transform_indices = @transform_4, window_bounds = array<i64: 1, 1>}]} {
    %c0_i32 = arith.constant 0 : i32
    %0 = arith.cmpi eq, %arg1, %c0_i32 : i32
    %1 = arith.extui %0 : i1 to i32
    %c0_i32_0 = arith.constant 0 : i32
    %2 = arith.cmpi ne, %1, %c0_i32_0 : i32
    scf.if %2 {
      %cst_23 = arith.constant 0.000000e+00 : f32
      %48 = vector.broadcast %cst_23 : f32 to vector<8x1xf32>
      %c0_24 = arith.constant 0 : index
      %c0_25 = arith.constant 0 : index
      %49 = vector.load %arg7[%c0_24, %c0_25] : memref<8x1xf32, #tpu.memory_space<vmem>>, vector<8x1xf32>
      tpu.vector_store %arg7[%c0_24, %c0_25], %48 {strides = array<i32>} : memref<8x1xf32, #tpu.memory_space<vmem>>, vector<8x1xf32>,
    } else {
    }
    %c0 = arith.constant 0 : index
    %c0_1 = arith.constant 0 : index
    %3 = vector.load %arg4[%c0, %c0_1] : memref<8x32xf32, #tpu.memory_space<vmem>>, vector<8x32xf32>
    %c0_2 = arith.constant 0 : index
    %c0_3 = arith.constant 0 : index
    %4 = vector.load %arg3[%c0_2, %c0_3] : memref<8x32xf32, #tpu.memory_space<vmem>>, vector<8x32xf32>
    %5 = arith.mulf %3, %4 : vector<8x32xf32>
    %cst = arith.constant dense<0.000000e+00> : vector<8xf32>
    %6 = vector.multi_reduction <add>, %5, %cst [1] : vector<8x32xf32> to vector<8xf32>
    %7 = vector.shape_cast %6 : vector<8xf32> to vector<8x1xf32>
    %8 = arith.mulf %3, %3 : vector<8x32xf32>
    %cst_4 = arith.constant dense<0.000000e+00> : vector<8xf32>
    %9 = vector.multi_reduction <add>, %8, %cst_4 [1] : vector<8x32xf32> to vector<8xf32>
    %10 = vector.shape_cast %9 : vector<8xf32> to vector<8x1xf32>
    %11 = arith.mulf %4, %4 : vector<8x32xf32>
    %cst_5 = arith.constant dense<0.000000e+00> : vector<8xf32>
    %12 = vector.multi_reduction <add>, %11, %cst_5 [1] : vector<8x32xf32> to vector<8xf32>
    %13 = vector.shape_cast %12 : vector<8xf32> to vector<8x1xf32>
    %cst_6 = arith.constant 1.000000e-24 : f32
    %14 = vector.broadcast %cst_6 : f32 to vector<8x1xf32>
    %15 = arith.maximumf %10, %14 : vector<8x1xf32>
    %16 = math.rsqrt %15 : vector<8x1xf32>
    %17 = arith.mulf %7, %16 : vector<8x1xf32>
    %cst_7 = arith.constant 1.000000e-24 : f32
    %18 = vector.broadcast %cst_7 : f32 to vector<8x1xf32>
    %19 = arith.maximumf %13, %18 : vector<8x1xf32>
    %20 = math.rsqrt %19 : vector<8x1xf32>
    %21 = arith.mulf %17, %20 : vector<8x1xf32>
    %c0_8 = arith.constant 0 : index
    %c0_9 = arith.constant 0 : index
    %22 = vector.load %arg5[%c0_8, %c0_9] : memref<8x32xf32, #tpu.memory_space<vmem>>, vector<8x32xf32>
    %c0_10 = arith.constant 0 : index
    %c0_11 = arith.constant 0 : index
    %23 = vector.load %arg2[%c0_10, %c0_11] : memref<8x32xf32, #tpu.memory_space<vmem>>, vector<8x32xf32>
    %24 = arith.mulf %22, %23 : vector<8x32xf32>
    %cst_12 = arith.constant dense<0.000000e+00> : vector<8xf32>
    %25 = vector.multi_reduction <add>, %24, %cst_12 [1] : vector<8x32xf32> to vector<8xf32>
    %26 = vector.shape_cast %25 : vector<8xf32> to vector<8x1xf32>
    %27 = arith.mulf %22, %22 : vector<8x32xf32>
    %cst_13 = arith.constant dense<0.000000e+00> : vector<8xf32>
    %28 = vector.multi_reduction <add>, %27, %cst_13 [1] : vector<8x32xf32> to vector<8xf32>
    %29 = vector.shape_cast %28 : vector<8xf32> to vector<8x1xf32>
    %30 = arith.mulf %23, %23 : vector<8x32xf32>
    %cst_14 = arith.constant dense<0.000000e+00> : vector<8xf32>
    %31 = vector.multi_reduction <add>, %30, %cst_14 [1] : vector<8x32xf32> to vector<8xf32>
    %32 = vector.shape_cast %31 : vector<8xf32> to vector<8x1xf32>
    %cst_15 = arith.constant 1.000000e-24 : f32
    %33 = vector.broadcast %cst_15 : f32 to vector<8x1xf32>
    %34 = arith.maximumf %29, %33 : vector<8x1xf32>
    %35 = math.rsqrt %34 : vector<8x1xf32>
    %36 = arith.mulf %26, %35 : vector<8x1xf32>
    %cst_16 = arith.constant 1.000000e-24 : f32
    %37 = vector.broadcast %cst_16 : f32 to vector<8x1xf32>
    %38 = arith.maximumf %32, %37 : vector<8x1xf32>
    %39 = math.rsqrt %38 : vector<8x1xf32>
    %40 = arith.mulf %36, %39 : vector<8x1xf32>
    %41 = arith.addf %21, %40 : vector<8x1xf32>
    %c0_17 = arith.constant 0 : index
    %c0_18 = arith.constant 0 : index
    %42 = vector.load %arg7[%c0_17, %c0_18] : memref<8x1xf32, #tpu.memory_space<vmem>>, vector<8x1xf32>
    %43 = arith.addf %42, %41 : vector<8x1xf32>
    %c0_19 = arith.constant 0 : index
    %c0_20 = arith.constant 0 : index
    %44 = vector.load %arg7[%c0_19, %c0_20] : memref<8x1xf32, #tpu.memory_space<vmem>>, vector<8x1xf32>
    tpu.vector_store %arg7[%c0_19, %c0_20], %43 {strides = array<i32>} : memref<8x1xf32, #tpu.memory_space<vmem>>, vector<8x1xf32>,
    %c0_i32_21 = arith.constant 0 : i32
    %45 = arith.cmpi eq, %arg1, %c0_i32_21 : i32
    %46 = arith.extui %45 : i1 to i32
    %c0_i32_22 = arith.constant 0 : i32
    %47 = arith.cmpi ne, %46, %c0_i32_22 : i32
    scf.if %47 {
      %c0_23 = arith.constant 0 : index
      %c0_24 = arith.constant 0 : index
      %48 = vector.load %arg7[%c0_23, %c0_24] : memref<8x1xf32, #tpu.memory_space<vmem>>, vector<8x1xf32>
      %49 = vector.shape_cast %48 : vector<8x1xf32> to vector<1x8x1xf32>
      %cst_25 = arith.constant dense<0.000000e+00> : vector<1xf32>
      %50 = vector.multi_reduction <add>, %49, %cst_25 [1, 2] : vector<1x8x1xf32> to vector<1xf32>
      %51 = vector.shape_cast %50 : vector<1xf32> to vector<1x1x1xf32>
      %52 = vector.extract %51[0, 0, 0] : f32 from vector<1x1x1xf32>
      %cst_26 = arith.constant -6.250000e-02 : f32
      %53 = arith.mulf %52, %cst_26 : f32
      %c0_27 = arith.constant 0 : index
      %c0_28 = arith.constant 0 : index
      %54 = memref.load %arg6[%c0_27, %c0_28] : memref<1x1xf32, #tpu.memory_space<smem>>
      memref.store %53, %arg6[%c0_27, %c0_28] : memref<1x1xf32, #tpu.memory_space<smem>>
    } else {
    }
    return
  }
  func.func @transform_0(%arg0: i32, %arg1: i32) -> (i32, i32) {
    %c1_i32 = arith.constant 1 : i32
    %0 = arith.muli %arg0, %c1_i32 : i32
    %1 = arith.addi %0, %arg1 : i32
    %c0_i32 = arith.constant 0 : i32
    %c0_i32_0 = arith.constant 0 : i32
    return %1, %c0_i32 : i32, i32
  }
  func.func @transform_1(%arg0: i32, %arg1: i32) -> (i32, i32) {
    %c1_i32 = arith.constant 1 : i32
    %0 = arith.muli %arg0, %c1_i32 : i32
    %1 = arith.addi %0, %arg1 : i32
    %c0_i32 = arith.constant 0 : i32
    %c0_i32_0 = arith.constant 0 : i32
    return %1, %c0_i32 : i32, i32
  }
  func.func @transform_2(%arg0: i32, %arg1: i32) -> (i32, i32) {
    %c1_i32 = arith.constant 1 : i32
    %0 = arith.muli %arg0, %c1_i32 : i32
    %1 = arith.addi %0, %arg1 : i32
    %c0_i32 = arith.constant 0 : i32
    %c0_i32_0 = arith.constant 0 : i32
    return %1, %c0_i32 : i32, i32
  }
  func.func @transform_3(%arg0: i32, %arg1: i32) -> (i32, i32) {
    %c1_i32 = arith.constant 1 : i32
    %0 = arith.muli %arg0, %c1_i32 : i32
    %1 = arith.addi %0, %arg1 : i32
    %c0_i32 = arith.constant 0 : i32
    %c0_i32_0 = arith.constant 0 : i32
    return %1, %c0_i32 : i32, i32
  }
  func.func @transform_4(%arg0: i32, %arg1: i32) -> (i32, i32) {
    %c0_i32 = arith.constant 0 : i32
    %c0_i32_0 = arith.constant 0 : i32
    return %arg0, %c0_i32 : i32, i32
  }
}

</mosaic_0001>

<llo_original>
// kernel: tpu_custom_call.1
$region0: #{tpu_custom_call.1}
  #allocation0 [shape = 'u32[]', space=smem, size = 0x4, offset = 0x4, fixed_abs, tag = 'smem constant byte address 0x4 - core index']
  #allocation1 [shape = 'u32[144,128]{1,0:T(1,128)}', space=vmem, size = 0x12000, scoped, tag = 'internal scratch']
  #allocation2 [shape = 'f32[8,1]{1,0:T(8,128)}', space=vmem, size = 0x1000, scoped, tag = 'scratch operand']
  %s0 = inlined_call_operand.hbm [shape: f32[8,32], index: 0, kind: input, shape index: {}]
  %s1 = inlined_call_operand.hbm [shape: f32[8,32], index: 1, kind: input, shape index: {}]
  %s2 = inlined_call_operand.hbm [shape: f32[8,32], index: 2, kind: input, shape index: {}]
  %s3 = inlined_call_operand.hbm [shape: f32[8,32], index: 3, kind: input, shape index: {}]
  %s4 = inlined_call_operand.hbm [shape: f32[1,1], index: 4, kind: output, shape index: {}]
  %s5 = sld [smem:[#allocation0]]
  $region50: #{tpu_custom_call.1} parent=0
    _
  %s7 = ssub.s32 1, %s5
  %s8 = scalar_select 0, %s7, %s5
  $region1: #{tpu_custom_call.1} parent=0
    #allocation3 [shape = 'u8[4096]{0}', space=vmem, size = 0x1000, scoped, tag = 'input window, operand 0, single buffered']
    #allocation4 [shape = 's32[1]{0}', space=sflag, size = 0x4, scoped, tag = 'scoped memory for tpu_custom_call.1']
    #allocation5 [shape = 's32[1]{0}', space=sflag, size = 0x4, scoped, tag = 'scoped memory for tpu_custom_call.1']
    #allocation6 [shape = 'u8[4096]{0}', space=vmem, size = 0x1000, scoped, tag = 'input window, operand 1, single buffered']
    #allocation7 [shape = 's32[1]{0}', space=sflag, size = 0x4, scoped, tag = 'scoped memory for tpu_custom_call.1']
    #allocation8 [shape = 'u8[4096]{0}', space=vmem, size = 0x1000, scoped, tag = 'input window, operand 2, single buffered']
    #allocation9 [shape = 'u8[4096]{0}', space=vmem, size = 0x1000, scoped, tag = 'input window, operand 3, single buffered']
    #allocation10 [shape = 's32[1]{0}', space=sflag, size = 0x4, scoped, tag = 'scoped memory for tpu_custom_call.1']
    #allocation11 [shape = 'u8[512]{0}', space=smem, size = 0x200, scoped, tag = 'output window, operand 0, single buffered']
    %9 = vsyncpa [#allocation4], 0
    %10 = vsyncpa [#allocation7], 0
    %11 = vsyncpa [#allocation10], 0
    %12 = vsyncpa [#allocation5], 0
    // Predicated region
    $region2: #{tpu_custom_call.1} parent=1 // pred_check
      _
    $region3: #{tpu_custom_call.1} parent=1 // pred_check_branch
      %14 = sbr.rel (0) target = $region5
    $region4: #{tpu_custom_call.1} parent=1 // pred_region
      %s15 = sadd.s32 0, 0
      %s17 = ssub.s32 128, 128
      %18 = vsyncadd [#allocation4], %s17
      %s19 = smul.addr %s15, 128
      %s20 = scalar_lea.hbm %s0, %s19
      %s22 = sshll.u32 [#allocation3], 4
      %s23 = int_to_ptr.vmem [resolvable:$true] %s22
      %25 = dma.hbm_to_vmem [thread:$0]  %s20, 128, %s23, [#allocation4]
    $region5: #{tpu_custom_call.1} parent=1 // pred_fallthru
      _
    // Predicated region
    $region6: #{tpu_custom_call.1} parent=1 // pred_check
      _
    $region7: #{tpu_custom_call.1} parent=1 // pred_check_branch
      %27 = sbr.rel (0) target = $region9
    $region8: #{tpu_custom_call.1} parent=1 // pred_region
      %s28 = sadd.s32 0, 0
      %s30 = ssub.s32 128, 128
      %31 = vsyncadd [#allocation7], %s30
      %s32 = smul.addr %s28, 128
      %s33 = scalar_lea.hbm %s1, %s32
      %s35 = sshll.u32 [#allocation6], 4
      %s36 = int_to_ptr.vmem [resolvable:$true] %s35
      %38 = dma.hbm_to_vmem [thread:$0]  %s33, 128, %s36, [#allocation7]
    $region9: #{tpu_custom_call.1} parent=1 // pred_fallthru
      _
    // Predicated region
    $region10: #{tpu_custom_call.1} parent=1 // pred_check
      _
    $region11: #{tpu_custom_call.1} parent=1 // pred_check_branch
      %40 = sbr.rel (0) target = $region13
    $region12: #{tpu_custom_call.1} parent=1 // pred_region
      %s41 = sadd.s32 0, 0
      %s43 = ssub.s32 128, 128
      %44 = vsyncadd [#allocation7], %s43
      %s45 = smul.addr %s41, 128
      %s46 = scalar_lea.hbm %s2, %s45
      %s48 = sshll.u32 [#allocation8], 4
      %s49 = int_to_ptr.vmem [resolvable:$true] %s48
      %51 = dma.hbm_to_vmem [thread:$0]  %s46, 128, %s49, [#allocation7]
    $region13: #{tpu_custom_call.1} parent=1 // pred_fallthru
      _
    // Predicated region
    $region14: #{tpu_custom_call.1} parent=1 // pred_check
      _
    $region15: #{tpu_custom_call.1} parent=1 // pred_check_branch
      %53 = sbr.rel (0) target = $region17
    $region16: #{tpu_custom_call.1} parent=1 // pred_region
      %s54 = sadd.s32 0, 0
      %s56 = ssub.s32 128, 128
      %57 = vsyncadd [#allocation10], %s56
      %s58 = smul.addr %s54, 128
      %s59 = scalar_lea.hbm %s3, %s58
      %s61 = sshll.u32 [#allocation9], 4
      %s62 = int_to_ptr.vmem [resolvable:$true] %s61
      %64 = dma.hbm_to_vmem [thread:$0]  %s59, 128, %s62, [#allocation10]
    $region17: #{tpu_custom_call.1} parent=1 // pred_fallthru
      _
    // Predicated region
    $region18: #{tpu_custom_call.1} parent=1 // pred_check
      _
    $region19: #{tpu_custom_call.1} parent=1 // pred_check_branch
      %66 = sbr.rel (0) target = $region21
    $region20: #{tpu_custom_call.1} parent=1 // pred_region
      %67 = dma.done [#allocation4], 128
    $region21: #{tpu_custom_call.1} parent=1 // pred_fallthru
      _
    // Predicated region
    $region22: #{tpu_custom_call.1} parent=1 // pred_check
      _
    $region23: #{tpu_custom_call.1} parent=1 // pred_check_branch
      %69 = sbr.rel (0) target = $region25
    $region24: #{tpu_custom_call.1} parent=1 // pred_region
      %70 = dma.done [#allocation7], 128
    $region25: #{tpu_custom_call.1} parent=1 // pred_fallthru
      _
    // Predicated region
    $region26: #{tpu_custom_call.1} parent=1 // pred_check
      _
    $region27: #{tpu_custom_call.1} parent=1 // pred_check_branch
      %72 = sbr.rel (0) target = $region29
    $region28: #{tpu_custom_call.1} parent=1 // pred_region
      %73 = dma.done [#allocation7], 128
    $region29: #{tpu_custom_call.1} parent=1 // pred_fallthru
      _
    // Predicated region
    $region30: #{tpu_custom_call.1} parent=1 // pred_check
      _
    $region31: #{tpu_custom_call.1} parent=1 // pred_check_branch
      %75 = sbr.rel (0) target = $region33
    $region32: #{tpu_custom_call.1} parent=1 // pred_region
      %76 = dma.done [#allocation10], 128
    $region33: #{tpu_custom_call.1} parent=1 // pred_fallthru
      _
    %s77 = sadd.s32 0, 0
    %s78 = sadd.s32 0, 0
    %s79 = sadd.s32 0, 0
    %s80 = sadd.s32 0, 0
    %p81 = scmp.eq.s32.totalorder 0, 0
    // Predicated region
    $region34: #{tpu_custom_call.1} parent=1 // pred_check
      %p82 = pneg %p81
    $region35: #{tpu_custom_call.1} parent=1 // pred_check_branch
      %84 = sbr.rel (%p82) target = $region37
    $region36: #{tpu_custom_call.1} parent=1 // pred_region
      %vm85 = vcmask 7168
      %86 = vst.msk [vmem:[#allocation2] sm:$0xff] %vm85, 0.0
    $region37: #{tpu_custom_call.1} parent=1 // pred_fallthru
      _
    %v87 = vld [vmem:[#allocation8] sm:$0xff]
    %v88 = vld [vmem:[#allocation6] sm:$0xff]
    %v89 = vmul.f32 %v87, %v88
    %vm90 = vcmask 261120
    %v91 = vsel %vm90, %v89, 0.0
    %92 = vadd.xlane.f32.xlu0 %v91
    %v93 = vpop.xlane.xlu0 %92
    %v94 = vmul.f32 %v87, %v87
    %v95 = vsel %vm90, %v94, 0.0
    %96 = vadd.xlane.f32.xlu0 %v95
    %v97 = vpop.xlane.xlu0 %96
    %v98 = vmul.f32 %v88, %v88
    %v99 = vsel %vm90, %v98, 0.0
    %100 = vadd.xlane.f32.xlu0 %v99
    %v101 = vpop.xlane.xlu0 %100
    %v102 = vmax.f32 %v97, 1e-24
    %v103 = vrsqrt.pop %v102
    %v104 = vmul.f32 %v93, %v103
    %v105 = vmax.f32 %v101, 1e-24
    %v106 = vrsqrt.pop %v105
    %v107 = vmul.f32 %v104, %v106
    %v108 = vld [vmem:[#allocation9] sm:$0xff]
    %v109 = vld [vmem:[#allocation3] sm:$0xff]
    %v110 = vmul.f32 %v108, %v109
    %v111 = vsel %vm90, %v110, 0.0
    %112 = vadd.xlane.f32.xlu0 %v111
    %v113 = vpop.xlane.xlu0 %112
    %v114 = vmul.f32 %v108, %v108
    %v115 = vsel %vm90, %v114, 0.0
    %116 = vadd.xlane.f32.xlu0 %v115
    %v117 = vpop.xlane.xlu0 %116
    %v118 = vmul.f32 %v109, %v109
    %v119 = vsel %vm90, %v118, 0.0
    %120 = vadd.xlane.f32.xlu0 %v119
    %v121 = vpop.xlane.xlu0 %120
    %v122 = vmax.f32 %v117, 1e-24
    %v123 = vrsqrt.pop %v122
    %v124 = vmul.f32 %v113, %v123
    %v125 = vmax.f32 %v121, 1e-24
    %v126 = vrsqrt.pop %v125
    %v127 = vmul.f32 %v124, %v126
    %v128 = vadd.f32 %v107, %v127
    %v129 = vld [vmem:[#allocation2] sm:$0xff]
    %v130 = vadd.f32 %v129, %v128
    %vm131 = vcmask 7168
    %132 = vst.msk [vmem:[#allocation2] sm:$0xff] %vm131, %v130
    // Predicated region
    $region38: #{tpu_custom_call.1} parent=1 // pred_check
      %p133 = pneg %p81
    $region39: #{tpu_custom_call.1} parent=1 // pred_check_branch
      %135 = sbr.rel (%p133) target = $region41
    $region40: #{tpu_custom_call.1} parent=1 // pred_region
      %v136 = vld [vmem:[#allocation2] sm:$0xff]
      %v137 = vsel %vm131, %v136, 0.0
      %138 = vadd.xlane.f32.xlu0 %v137
      %v139 = vpop.xlane.xlu0 %138
      %v140 = vrot.slane %v139, 4
      %v141 = vadd.f32 %v139, %v140
      %v142 = vrot.slane %v141, 2
      %v143 = vadd.f32 %v141, %v142
      %v144 = vrot.slane %v143, 1
      %v145 = vadd.f32 %v143, %v144
      %s146 = vtos %v145
      %s147 = smul.f32 %s146, -0.0625
      %s148 = scalar_lea.smem [#allocation11], 0
      %149 = sst [smem:[%s148]] %s147
    $region41: #{tpu_custom_call.1} parent=1 // pred_fallthru
      _
    // Predicated region
    $region42: #{tpu_custom_call.1} parent=1 // pred_check
      _
    $region43: #{tpu_custom_call.1} parent=1 // pred_check_branch
      %151 = sbr.rel (0) target = $region45
    $region44: #{tpu_custom_call.1} parent=1 // pred_region
      %s153 = ssub.s32 16, 16
      %154 = vsyncadd [#allocation5], %s153
      %157 = dma.smem_to_hbm [#allocation11], 16, %s4, [#allocation5]
    $region45: #{tpu_custom_call.1} parent=1 // pred_fallthru
      _
    // Predicated region
    $region46: #{tpu_custom_call.1} parent=1 // pred_check
      _
    $region47: #{tpu_custom_call.1} parent=1 // pred_check_branch
      %159 = sbr.rel (0) target = $region49
    $region48: #{tpu_custom_call.1} parent=1 // pred_region
      %160 = dma.done [#allocation5], 16
    $region49: #{tpu_custom_call.1} parent=1 // pred_fallthru
      _
    %161 = sfence
    %162 = vsyncpa [#allocation4], 1
    %163 = vsyncpa [#allocation7], 1
    %164 = vsyncpa [#allocation10], 1
    %165 = vsyncpa [#allocation5], 1

</llo_original>
